<compile_context>
chip_gen: v5e
topology: v5e:2x2
jax: 0.10.0
libtpu: 0.0.40
codegen_flags: <defaults>
</compile_context>

<pallas_src>
import functools

import jax
import jax.numpy as jnp
import numpy as np
from jax import lax
from jax.experimental import pallas as pl
from jax.experimental.pallas import tpu as pltpu


# ---------------------------------------------------------------------------
# pltpu.roll direction probe (run once, OUTSIDE any jit trace)
# ---------------------------------------------------------------------------
@functools.lru_cache(maxsize=None)
def _roll_sign():
    """+1 if pltpu.roll matches jnp.roll (out[i] = x[i - shift]), else -1."""
    def k(x_ref, o_ref):
        o_ref[...] = pltpu.roll(x_ref[...], shift=1, axis=1)

    x = jnp.broadcast_to(jnp.arange(128, dtype=jnp.float32)[None, :], (8, 128))
    y = pl.pallas_call(k, out_shape=jax.ShapeDtypeStruct((8, 128), jnp.float32))(x)
    return 1 if abs(float(y[0, 1])) < 0.5 else -1


# ---------------------------------------------------------------------------
# tap tables: circular-shift amounts + zero-border masks for an odd KxK "same"
# cross-correlation on an (H, W) grid flattened into the lane dimension.
# ---------------------------------------------------------------------------
@functools.lru_cache(maxsize=None)
def _tap_table(kh, kw, h, w):
    hw = h * w
    ys, xs = np.divmod(np.arange(hw), w)
    sign = _roll_sign()
    shifts, masks = [], []
    for i in range(kh):
        for j in range(kw):
            di, dj = i - kh // 2, j - kw // 2
            logical = (-(di * w + dj)) % hw            # jnp.roll-convention shift
            shifts.append(int((sign * logical) % hw))  # shift to pass to pltpu.roll
            valid = (ys + di >= 0) & (ys + di < h) & (xs + dj >= 0) & (xs + dj < w)
            masks.append(valid.astype(np.float32))
    return tuple(shifts), np.stack(masks, axis=0)      # (kh*kw, hw)


# ---------------------------------------------------------------------------
# Pallas kernels
# ---------------------------------------------------------------------------
def _build_patches(src, c, shifts, mask, p_ref):
    """Write rolled+masked taps of `src` (c, HW) into rows [0, n_taps*c) of the
    f32 VMEM scratch.  Center tap (shift 0) skips roll + mask (mask is all 1)."""
    n_taps = len(shifts)
    for t in range(n_taps):
        if shifts[t] == 0:
            tap = src
        else:
            tap = pltpu.roll(src, shift=shifts[t], axis=1) * mask[t:t + 1, :]
        p_ref[pl.ds(t * c, c), :] = tap
    return p_ref[0:n_taps * c, :]


def _make_estfeat_kernel(shifts, inv_hw):
    """Estimator conv (3x3, ReLU) with the global average pool fused into the
    epilogue: emits (Cf, 1) per image instead of (Cf, HW)."""
    def kernel(x_ref, m_ref, w_ref, b_ref, o_ref, p_ref):
        x = x_ref[0]                                   # (C_in, HW) f32
        m = m_ref[...]                                 # (n_taps, HW) f32
        patches = _build_patches(x, x.shape[0], shifts, m, p_ref).astype(jnp.bfloat16)
        acc = jnp.dot(w_ref[...], patches, preferred_element_type=jnp.float32)
        acc = jnp.maximum(acc + b_ref[...], 0.0)
        o_ref[0] = jnp.sum(acc, axis=1, keepdims=True) * inv_hw     # GAP -> (Cf, 1)
    return kernel


def _make_trunk_kernel(c_in, cf, shifts3, shifts5, ks2):
    """Fully fused SR trunk + degradation.  All six convs share one f32 patch
    scratch; each conv is one bf16 MXU matmul (K = C*9) with bias / ReLU /
    residual-skip fused into the f32 epilogue.  The estimated per-image blur is
    then applied to the in-register sr tile (scales = border_mask * k_column,
    a single broadcast multiply), emitting sr and sr2lr in the same step."""
    def kernel(x_ref, m3_ref, m5_ref,
               wf_ref, bf_ref, w1_ref, b1_ref, w2_ref, b2_ref,
               w3_ref, b3_ref, w4_ref, b4_ref, wl_ref, bl_ref,
               k_ref, sr_ref, lr2_ref, p_ref):
        m3 = m3_ref[...]                               # (9, HW)

        def conv(src, c, w_r, b_r, relu=False, skip=None):
            patches = _build_patches(src, c, shifts3, m3, p_ref).astype(jnp.bfloat16)
            acc = jnp.dot(w_r[...], patches, preferred_element_type=jnp.float32)
            acc = acc + b_r[...]
            if relu:
                acc = jnp.maximum(acc, 0.0)
            if skip is not None:
                acc = acc + skip
            return acc

        x = x_ref[0]                                   # (C_in, HW) f32
        fea = conv(x, c_in, wf_ref, bf_ref, relu=True)             # conv_first
        y = conv(fea, cf, w1_ref, b1_ref, relu=True)               # RB conv1
        fea = conv(y, cf, w2_ref, b2_ref, skip=fea)                # RB conv2 (searched)
        y = conv(fea, cf, w3_ref, b3_ref, relu=True)               # DPCAB conv1
        fea = conv(y, cf, w4_ref, b4_ref, skip=fea)                # DPCAB conv2 (searched)
        sr = conv(fea, cf, wl_ref, bl_ref, skip=x)                 # conv_last + global skip
        sr_ref[0] = sr

        # sr -> sr2lr with the per-image estimated ksize x ksize kernel.
        # TODO(synk): zero-'same'-padded cross-correlation assumed for the
        # degradation, matching the reference implementation of this step.
        scales = m5_ref[...] * k_ref[0]                # (ks2, HW) = mask * k column
        blur = jnp.zeros_like(sr)
        for t in range(ks2):
            r = sr if shifts5[t] == 0 else pltpu.roll(sr, shift=shifts5[t], axis=1)
            blur = blur + r * scales[t:t + 1, :]
        lr2_ref[0] = blur
    return kernel


# ---------------------------------------------------------------------------
# wrappers
# ---------------------------------------------------------------------------
def _conv_wmat(w, cw=None):
    """(O, C, KH, KW) -> (O, KH*KW*C) bf16, tap-major / channel-minor K order,
    with the soft channel mask folded in (== SearchConv2d input masking)."""
    O, C, KH, KW = w.shape
    w_eff = w if cw is None else w * cw[None, :, None, None]
    return jnp.transpose(w_eff, (0, 2, 3, 1)).reshape(O, KH * KW * C).astype(jnp.bfloat16)


def est_features_gap(x, w, b, H, W):
    """Fused Estimator conv + ReLU + global average pool -> (B, Cf)."""
    B, C, HW = x.shape
    O, _, KH, KW = w.shape
    n_taps = KH * KW
    shifts, mask_np = _tap_table(KH, KW, H, W)
    wmat = _conv_wmat(w)
    bvec = b.reshape(O, 1).astype(jnp.float32)
    mask = jnp.asarray(mask_np)
    out = pl.pallas_call(
        _make_estfeat_kernel(shifts, 1.0 / HW),
        grid=(B,),
        in_specs=[pl.BlockSpec((1, C, HW), lambda i: (i, 0, 0)),
                  pl.BlockSpec((n_taps, HW), lambda i: (0, 0)),
                  pl.BlockSpec((O, n_taps * C), lambda i: (0, 0)),
                  pl.BlockSpec((O, 1), lambda i: (0, 0))],
        out_specs=pl.BlockSpec((1, O, 1), lambda i: (i, 0, 0)),
        out_shape=jax.ShapeDtypeStruct((B, O, 1), jnp.float32),
        scratch_shapes=[pltpu.VMEM((n_taps * C, HW), jnp.float32)],
        compiler_params=pltpu.CompilerParams(dimension_semantics=("parallel",)),
    )(x, mask, wmat, bvec)
    return out[:, :, 0]                                            # (B, Cf)


def sr_trunk_and_degrade(x, params, cw_rb, cw_dp, est_kernel_flat, H, W, ksize):
    """One pallas_call per batch element: full SR trunk + degradation.
    At B=2, each v7x TensorCore gets one compute-resident step (inputs are a
    few KiB, so no exposed DMA); for larger B the same grid pipelines."""
    B, C_in, HW = x.shape
    Cf = params["conv_first_w"].shape[0]
    ks2 = ksize * ksize
    s3, m3_np = _tap_table(3, 3, H, W)
    s5, m5_np = _tap_table(ksize, ksize, H, W)
    m3 = jnp.asarray(m3_np)
    m5 = jnp.asarray(m5_np)

    def wb(name, cw=None):
        return (_conv_wmat(params[name + "_w"], cw),
                params[name + "_b"].reshape(-1, 1).astype(jnp.float32))

    wf, bfv = wb("conv_first")
    w1, b1 = wb("rb_conv1")
    w2, b2 = wb("rb_conv2", cw_rb)
    w3, b3 = wb("dp_conv1")
    w4, b4 = wb("dp_conv2", cw_dp)
    wl, bl = wb("conv_last")
    kcol = est_kernel_flat.astype(jnp.float32)[:, :, None]         # (B, ks2, 1)

    def cspec(arr):                                                # resident constant
        return pl.BlockSpec(arr.shape, lambda i: (0, 0))

    in_specs = [
        pl.BlockSpec((1, C_in, HW), lambda i: (i, 0, 0)),
        cspec(m3), cspec(m5),
        cspec(wf), cspec(bfv), cspec(w1), cspec(b1), cspec(w2), cspec(b2),
        cspec(w3), cspec(b3), cspec(w4), cspec(b4), cspec(wl), cspec(bl),
        pl.BlockSpec((1, ks2, 1), lambda i: (i, 0, 0)),
    ]
    out_specs = (pl.BlockSpec((1, C_in, HW), lambda i: (i, 0, 0)),
                 pl.BlockSpec((1, C_in, HW), lambda i: (i, 0, 0)))
    out_shape = (jax.ShapeDtypeStruct((B, C_in, HW), jnp.float32),
                 jax.ShapeDtypeStruct((B, C_in, HW), jnp.float32))

    sr, sr2lr = pl.pallas_call(
        _make_trunk_kernel(C_in, Cf, s3, s5, ks2),
        grid=(B,),
        in_specs=in_specs,
        out_specs=out_specs,
        out_shape=out_shape,
        scratch_shapes=[pltpu.VMEM((9 * Cf, HW), jnp.float32)],
        compiler_params=pltpu.CompilerParams(dimension_semantics=("parallel",)),
    )(x, m3, m5, wf, bfv, w1, b1, w2, b2, w3, b3, w4, b4, wl, bl, kcol)
    return sr, sr2lr


def estimator_head_jnp(g, w1, b1, w2, b2, cw):
    """Linear+ReLU -> SearchLinear (input-channel mask folded) -> softmax.
    < one vreg of work -> plain jnp (no pallas launch)."""
    h = jnp.maximum(g @ w1.T + b1[None, :], 0.0)
    k = h @ (w2 * cw[None, :]).T + b2[None, :]
    return jax.nn.softmax(k, axis=-1)


def compute_channel_weights(alpha, channel_options, weight, sum_dims):
    """Mirror of SearchModel.compute_channel_weights (ordered channels)."""
    a = jax.nn.softmax(alpha.astype(jnp.float32), axis=-1)
    abs_sums = jnp.sum(jnp.abs(weight.astype(jnp.float32)), axis=sum_dims)
    order = jnp.argsort(-abs_sums)            # torch.sort(descending=True).indices
    rank = jnp.argsort(order)
    mask = (rank[None, :] < channel_options[:, None]).astype(jnp.float32)
    return jnp.sum(a[:, None] * mask, axis=0)  # (num_channels,)


# ---------------------------------------------------------------------------
# SearchModel.forward equivalent
# ---------------------------------------------------------------------------
def search_model_forward(lr, alphas, channel_sets, params):
    B, C_in, H, W = lr.shape
    HW = H * W
    ks2 = params["est_lin2_w"].shape[0]
    ksize = int(round(ks2 ** 0.5))

    # ---- set_model_width: soft channel masks for each searched layer ----
    cw_rb = compute_channel_weights(alphas[0], channel_sets[0], params["rb_conv2_w"], (0, 2, 3))
    cw_dp = compute_channel_weights(alphas[1], channel_sets[1], params["dp_conv2_w"], (0, 2, 3))
    cw_el = compute_channel_weights(alphas[2], channel_sets[2], params["est_lin2_w"], (0,))

    x = lr.reshape(B, C_in, HW)               # spatial -> lane dim for the hot path

    # ---- Estimator branch -> per-image blur kernel ----
    g = est_features_gap(x, params["est_conv_w"], params["est_conv_b"], H, W)
    est_kernel_flat = estimator_head_jnp(g, params["est_lin1_w"], params["est_lin1_b"],
                                         params["est_lin2_w"], params["est_lin2_b"], cw_el)
    est_kernel = est_kernel_flat.reshape(B, 1, ksize, ksize)

    # ---- SR trunk + sr2lr degradation, fully fused ----
    sr_flat, sr2lr_flat = sr_trunk_and_degrade(x, params, cw_rb, cw_dp,
                                               est_kernel_flat, H, W, ksize)
    return sr_flat.reshape(B, C_in, H, W), est_kernel, sr2lr_flat.reshape(B, C_in, H, W)


# ---------------------------------------------------------------------------
# pure-JAX reference (lax.conv, f32) for correctness verification
# ---------------------------------------------------------------------------
def reference_forward(lr, alphas, channel_sets, params):
    B, C_in, H, W = lr.shape
    ks2 = params["est_lin2_w"].shape[0]
    ksize = int(round(ks2 ** 0.5))
    cw_rb = compute_channel_weights(alphas[0], channel_sets[0], params["rb_conv2_w"], (0, 2, 3))
    cw_dp = compute_channel_weights(alphas[1], channel_sets[1], params["dp_conv2_w"], (0, 2, 3))
    cw_el = compute_channel_weights(alphas[2], channel_sets[2], params["est_lin2_w"], (0,))

    def conv(x, w, bias, relu=False, cw=None):
        w_eff = w if cw is None else w * cw[None, :, None, None]
        y = lax.conv_general_dilated(x, w_eff, (1, 1), "SAME",
                                     dimension_numbers=("NCHW", "OIHW", "NCHW"))
        y = y + bias[None, :, None, None]
        return jnp.maximum(y, 0.0) if relu else y

    ef = conv(lr, params["est_conv_w"], params["est_conv_b"], relu=True)
    g = jnp.mean(ef, axis=(2, 3))
    estk = estimator_head_jnp(g, params["est_lin1_w"], params["est_lin1_b"],
                              params["est_lin2_w"], params["est_lin2_b"], cw_el)

    fea = conv(lr, params["conv_first_w"], params["conv_first_b"], relu=True)
    y = conv(fea, params["rb_conv1_w"], params["rb_conv1_b"], relu=True)
    fea = conv(y, params["rb_conv2_w"], params["rb_conv2_b"], cw=cw_rb) + fea
    y = conv(fea, params["dp_conv1_w"], params["dp_conv1_b"], relu=True)
    fea = conv(y, params["dp_conv2_w"], params["dp_conv2_b"], cw=cw_dp) + fea
    sr = lr + conv(fea, params["conv_last_w"], params["conv_last_b"])

    pad = ksize // 2
    srp = jnp.pad(sr, ((0, 0), (0, 0), (pad, pad), (pad, pad)))
    sr2lr = jnp.zeros_like(sr)
    for i in range(ksize):
        for j in range(ksize):
            sr2lr = sr2lr + srp[:, :, i:i + H, j:j + W] * \
                estk[:, i * ksize + j][:, None, None, None]
    return sr, estk.reshape(B, 1, ksize, ksize), sr2lr


def init_params(key, c_in, cf, ksize):
    ks = jax.random.split(key, 18)
    n = lambda k, shape: 0.1 * jax.random.normal(k, shape, jnp.float32)
    return {
        "conv_first_w": n(ks[0], (cf, c_in, 3, 3)), "conv_first_b": n(ks[1], (cf,)),
        "rb_conv1_w": n(ks[2], (cf, cf, 3, 3)),     "rb_conv1_b": n(ks[3], (cf,)),
        "rb_conv2_w": n(ks[4], (cf, cf, 3, 3)),     "rb_conv2_b": n(ks[5], (cf,)),
        "dp_conv1_w": n(ks[6], (cf, cf, 3, 3)),     "dp_conv1_b": n(ks[7], (cf,)),
        "dp_conv2_w": n(ks[8], (cf, cf, 3, 3)),     "dp_conv2_b": n(ks[9], (cf,)),
        "conv_last_w": n(ks[10], (c_in, cf, 3, 3)), "conv_last_b": n(ks[11], (c_in,)),
        "est_conv_w": n(ks[12], (cf, c_in, 3, 3)),  "est_conv_b": n(ks[13], (cf,)),
        "est_lin1_w": n(ks[14], (cf, cf)),          "est_lin1_b": n(ks[15], (cf,)),
        "est_lin2_w": n(ks[16], (ksize * ksize, cf)),
        "est_lin2_b": n(ks[17], (ksize * ksize,)),
    }


if __name__ == "__main__":
    B, C_in, H, W = 2, 3, 16, 16
    Cf, KSIZE = 8, 5

    _roll_sign()    # probe pltpu.roll direction once, outside any jit trace

    keys = jax.random.split(jax.random.PRNGKey(0), 6)
    params = init_params(keys[0], C_in, Cf, KSIZE)
    lr = jax.random.normal(keys[1], (B, C_in, H, W), jnp.float32)
    alphas = (jax.random.normal(keys[2], (3,), jnp.float32),
              jax.random.normal(keys[3], (3,), jnp.float32),
              jax.random.normal(keys[4], (3,), jnp.float32))
    channel_sets = jnp.array([[Cf, 6, 4], [Cf, 6, 4], [Cf, 6, 4]], dtype=jnp.int32)

    sr, est_kernel, sr2lr = jax.jit(search_model_forward)(lr, alphas, channel_sets, params)
    jax.block_until_ready((sr, est_kernel, sr2lr))

    assert sr.shape == (B, C_in, H, W)
    assert est_kernel.shape == (B, 1, KSIZE, KSIZE)
    assert sr2lr.shape == (B, C_in, H, W)

    # numerical check against the pure-JAX (f32 lax.conv) reference;
    # tolerance covers bf16 MXU operands in the Pallas path.
    sr_r, estk_r, sr2lr_r = jax.jit(reference_forward)(lr, alphas, channel_sets, params)
    for got, ref in ((sr, sr_r), (est_kernel, estk_r), (sr2lr, sr2lr_r)):
        err = float(jnp.max(jnp.abs(got - ref)))
        assert err < 5e-2, f"max abs err vs reference: {err}"

    print("KERNEL_OK")
</pallas_src>

<mosaic_0001>
module attributes {stable_mosaic.version = 11 : i64} {
  func.func @k(%arg0: memref<8x128xf32, #tpu.memory_space<vmem>>, %arg1: memref<8x128xf32, #tpu.memory_space<vmem>>) attributes {dimension_semantics = [], scalar_prefetch = 0 : i64, scratch_operands = 0 : i64, tpu.core_type = #tpu.core_type<tc>} {
    %c0 = arith.constant 0 : index
    %c0_0 = arith.constant 0 : index
    %0 = vector.load %arg0[%c0, %c0_0] : memref<8x128xf32, #tpu.memory_space<vmem>>, vector<8x128xf32>
    %c1_i32 = arith.constant 1 : i32
    %1 = tpu.dynamic_rotate %0 by %c1_i32 dim 1 : vector<8x128xf32>, i32 -> vector<8x128xf32>
    %c0_1 = arith.constant 0 : index
    %c0_2 = arith.constant 0 : index
    %2 = vector.load %arg1[%c0_1, %c0_2] : memref<8x128xf32, #tpu.memory_space<vmem>>, vector<8x128xf32>
    tpu.vector_store %arg1[%c0_1, %c0_2], %1 {strides = array<i32>} : memref<8x128xf32, #tpu.memory_space<vmem>>, vector<8x128xf32>,
    return
  }
}

</mosaic_0001>

<llo_original>
// kernel: tpu_custom_call.1
$region0: #{tpu_custom_call.1}
  #allocation0 [shape = 'u32[]', space=smem, size = 0x4, offset = 0x4, fixed_abs, tag = 'smem constant byte address 0x4 - core index']
  #allocation1 [shape = 'u32[72,128]{1,0:T(1,128)}', space=vmem, size = 0x9000, scoped, tag = 'internal scratch']
  %s0 = inlined_call_operand.hbm [shape: f32[8,128], index: 0, kind: input, shape index: {}]
  %s1 = inlined_call_operand.hbm [shape: f32[8,128], index: 1, kind: output, shape index: {}]
  %s2 = sld [smem:[#allocation0]]
  $region18: #{tpu_custom_call.1} parent=0
    _
  %s4 = ssub.s32 1, %s2
  %s5 = scalar_select 0, %s4, %s2
  $region1: #{tpu_custom_call.1} parent=0
    #allocation2 [shape = 'u8[4096]{0}', space=vmem, size = 0x1000, scoped, tag = 'input window, operand 0, single buffered']
    #allocation3 [shape = 's32[1]{0}', space=sflag, size = 0x4, scoped, tag = 'scoped memory for tpu_custom_call.1']
    #allocation4 [shape = 's32[1]{0}', space=sflag, size = 0x4, scoped, tag = 'scoped memory for tpu_custom_call.1']
    #allocation5 [shape = 'u8[4096]{0}', space=vmem, size = 0x1000, scoped, tag = 'output window, operand 0, single buffered']
    %6 = vsyncpa [#allocation3], 0
    %7 = vsyncpa [#allocation4], 0
    // Predicated region
    $region2: #{tpu_custom_call.1} parent=1 // pred_check
      _
    $region3: #{tpu_custom_call.1} parent=1 // pred_check_branch
      %9 = sbr.rel (0) target = $region5
    $region4: #{tpu_custom_call.1} parent=1 // pred_region
      %11 = vsyncadd [#allocation3], 0
      %s13 = sshll.u32 %s0, 4
      %s14 = int_to_ptr.hbm [resolvable:$true] %s13
      %s15 = sshll.u32 [#allocation2], 4
      %s16 = int_to_ptr.vmem [resolvable:$true] %s15
      %18 = dma.hbm_to_vmem [thread:$0]  %s14, 128, %s16, [#allocation3]
    $region5: #{tpu_custom_call.1} parent=1 // pred_fallthru
      _
    // Predicated region
    $region6: #{tpu_custom_call.1} parent=1 // pred_check
      _
    $region7: #{tpu_custom_call.1} parent=1 // pred_check_branch
      %20 = sbr.rel (0) target = $region9
    $region8: #{tpu_custom_call.1} parent=1 // pred_region
      %22 = dma.done [#allocation3], 128
    $region9: #{tpu_custom_call.1} parent=1 // pred_fallthru
      _
    %v23 = vld [vmem:[#allocation2] sm:$0xff]
    %24 = vrot.lane.b32.xlu0 %v23, 1
    %v25 = vpop.permute.xlu0 %24
    %26 = vst [vmem:[#allocation5] sm:$0xff] %v25
    // Predicated region
    $region10: #{tpu_custom_call.1} parent=1 // pred_check
      _
    $region11: #{tpu_custom_call.1} parent=1 // pred_check_branch
      %28 = sbr.rel (0) target = $region13
    $region12: #{tpu_custom_call.1} parent=1 // pred_region
      %30 = vsyncadd [#allocation4], 0
      %s32 = sshll.u32 [#allocation5], 4
      %s33 = int_to_ptr.vmem [resolvable:$true] %s32
      %s34 = sshll.u32 %s1, 4
      %s35 = int_to_ptr.hbm [resolvable:$true] %s34
      %37 = dma.vmem_to_hbm [thread:$0]  %s33, 128, %s35, [#allocation4]
    $region13: #{tpu_custom_call.1} parent=1 // pred_fallthru
      _
    // Predicated region
    $region14: #{tpu_custom_call.1} parent=1 // pred_check
      _
    $region15: #{tpu_custom_call.1} parent=1 // pred_check_branch
      %39 = sbr.rel (0) target = $region17
    $region16: #{tpu_custom_call.1} parent=1 // pred_region
      %41 = dma.done [#allocation4], 128
    $region17: #{tpu_custom_call.1} parent=1 // pred_fallthru
      _
    %42 = vsyncpa [#allocation3], 1
    %43 = vsyncpa [#allocation4], 1

</llo_original>
